<compile_context>
chip_gen: v6e
topology: v6e:2x2x1
jax: 0.10.0
libtpu: 0.0.40
codegen_flags: <defaults>
</compile_context>

<pallas_src>
import numpy as np

import jax
import jax.numpy as jnp
from jax.experimental import pallas as pl
from jax.experimental.pallas import tpu as pltpu


# ---------------------------------------------------------------------------
# Fused kernel. Per grid step processes NB images.
#   x_ref : (NB, C, PL)      zero-padded NCHW input, spatial flattened (bf16)
#   ws_ref: (OC, 9*C)        conv weight stacked over the 9 taps (bf16)
#   bc_ref: (OC, 1)          conv bias (f32)
#   m_ref : (NCLS, OC, Lr)   effective classifier weight (pool+flatten+mask folded)
#   bl_ref: (1, NCLS)        classifier bias
#   o_ref : (1, NB, NCLS)    output logits block
# ---------------------------------------------------------------------------
def _make_fused_kernel(NB, C, OC, NCLS, W2, Lr):
    offsets = tuple(dy * W2 + dx for dy in range(3) for dx in range(3))

    def kernel(x_ref, ws_ref, bc_ref, m_ref, bl_ref, o_ref):
        ws = ws_ref[...]                                    # (OC, 9C)  bf16
        bc = bc_ref[...]                                    # (OC, 1)   f32
        bl = bl_ref[...]                                    # (1, NCLS) f32
        lane = jax.lax.broadcasted_iota(jnp.int32, (1, NCLS), 1)

        for n in range(NB):                                 # NB <= 2: bounded unroll
            # Stack the 9 shifted taps along the contraction (sublane) axis:
            #   xs[t*C + c, p] = x_pad[c, p + off_t]        -> (9C, Lr)
            xs = jnp.concatenate(
                [x_ref[n, :, off:off + Lr] for off in offsets], axis=0)

            # Fused 3x3 conv (padding=1) = ONE K=9C MXU matmul, f32 accumulation.
            acc = jnp.dot(ws, xs, preferred_element_type=jnp.float32)   # (OC, Lr)

            # Dropout2d(0.5) -> identity (eval), then bias + ReLU.
            y = jnp.maximum(acc + bc, 0.0)                              # (OC, Lr)

            # AvgPool(3,3) + flatten + Linear folded into M:
            #   out[k] = sum_{oc,p} y[oc,p] * M[k,oc,p] + bl[k]
            row = bl                                                    # (1, NCLS)
            for k in range(NCLS):
                s = jnp.sum(y * m_ref[k], axis=1, keepdims=True)        # lane reduce
                s = jnp.sum(s, axis=0, keepdims=True)                   # sublane reduce
                row = row + s * (lane == k).astype(jnp.float32)
            o_ref[0, n:n + 1, :] = row                                  # direct row write

    return kernel


def _pick_block_batch(n):
    # Prefer >= 2 grid steps so the "parallel" grid axis can shard across v7x's two
    # TensorCores and DMA prefetch of step i+1 overlaps compute of step i.
    # NB is capped at 2 to bound register liveness of the static per-image unroll.
    for nb in (2, 1):
        if n % nb == 0 and n // nb >= 2:
            return nb
    return 1


def my_dil_conv_net_forward(x, params, *, conv_dtype=jnp.bfloat16):
    """Forward pass of MyDilConvNet.  x: (N, C, H, W) float32 -> (N, 5) float32."""
    conv_w = params["conv_w"].astype(jnp.float32)           # (OC, C, 3, 3)
    conv_b = params["conv_b"].astype(jnp.float32)           # (OC,)
    lin_w = params["lin_w"].astype(jnp.float32)             # (NCLS, OC*Hp*Wp)
    lin_b = params["lin_b"].astype(jnp.float32)             # (NCLS,)

    N, C, H, W = x.shape
    OC = conv_w.shape[0]
    NCLS = lin_w.shape[0]
    Hp, Wp = H // 3, W // 3                                 # AvgPool2d(3,3) floors
    assert Hp >= 1 and Wp >= 1, "spatial dims must be >= 3"
    assert lin_w.shape[1] == OC * Hp * Wp

    H2, W2 = H + 2, W + 2
    PL = H2 * W2                                            # padded positions per image
    Lr = H * W2 - 2                                         # conv rows (incl. masked wrap cols)

    # ---- input prep: stay in NCHW (no transpose needed in lane-dense layout),
    #      zero-pad the border, flatten spatial (free reshape), cast to bf16 ------
    xp = jnp.pad(x.astype(jnp.float32), ((0, 0), (0, 0), (1, 1), (1, 1)))   # (N,C,H2,W2)
    xflat = xp.reshape(N, C, PL).astype(conv_dtype)

    # ---- conv weight stacked over taps: ws[oc, t*C+c] = conv_w[oc, c, dy, dx] ----
    ws = jnp.transpose(conv_w, (0, 2, 3, 1)).reshape(OC, 9 * C).astype(conv_dtype)
    bc = conv_b.reshape(OC, 1)

    # ---- effective classifier weight M[k, oc, p] (tiny, weights-only work) ------
    #   p = h*W2 + w -> pooled cell (h//3, w//3); weight = lin_w[k, oc, i, j]/9 for
    #   positions inside the pooled region, 0 for wrap-around / leftover positions.
    p_idx = np.arange(Lr)
    h_idx = p_idx // W2
    w_idx = p_idx % W2
    valid = (h_idx < 3 * Hp) & (w_idx < 3 * Wp)
    i_idx = np.minimum(h_idx // 3, Hp - 1)
    j_idx = np.minimum(w_idx // 3, Wp - 1)
    wl4 = lin_w.reshape(NCLS, OC, Hp, Wp)
    m = wl4[:, :, i_idx, j_idx]                                      # (NCLS, OC, Lr)
    m = m * jnp.asarray(valid, jnp.float32)[None, None, :] * (1.0 / 9.0)
    bl = lin_b.reshape(1, NCLS)

    NB = _pick_block_batch(N)
    G = N // NB
    kernel = _make_fused_kernel(NB, C, OC, NCLS, W2, Lr)

    itemsize = jnp.dtype(conv_dtype).itemsize
    flops = 2 * N * Lr * (OC * 9 * C + NCLS * OC)
    bytes_accessed = (N * C * PL * itemsize + OC * 9 * C * itemsize
                      + NCLS * OC * Lr * 4 + OC * 4 + NCLS * 4 + N * NCLS * 4)

    out = pl.pallas_call(
        kernel,
        out_shape=jax.ShapeDtypeStruct((G, NB, NCLS), jnp.float32),
        grid_spec=pltpu.PrefetchScalarGridSpec(
            num_scalar_prefetch=0,
            grid=(G,),
            in_specs=[
                pl.BlockSpec((NB, C, PL), lambda b: (b, 0, 0)),
                pl.BlockSpec((OC, 9 * C), lambda b: (0, 0)),
                pl.BlockSpec((OC, 1), lambda b: (0, 0)),
                pl.BlockSpec((NCLS, OC, Lr), lambda b: (0, 0, 0)),
                pl.BlockSpec((1, NCLS), lambda b: (0, 0)),
            ],
            out_specs=pl.BlockSpec((1, NB, NCLS), lambda b: (b, 0, 0)),
        ),
        compiler_params=pltpu.CompilerParams(
            dimension_semantics=("parallel",),
            vmem_limit_bytes=32 * 1024 * 1024,   # safe on v5e/v6e/v7x; usage here is <1 MiB
        ),
        cost_estimate=pl.CostEstimate(
            flops=flops, transcendentals=0, bytes_accessed=int(bytes_accessed)),
    )(xflat, ws, bc, m, bl)

    return out.reshape(N, NCLS)


# ---------------------------------------------------------------------------
# Pure-JAX reference (eval semantics) for correctness checking.
# ---------------------------------------------------------------------------
def reference_forward(x, params):
    conv_w, conv_b, lin_w, lin_b = (params["conv_w"], params["conv_b"],
                                    params["lin_w"], params["lin_b"])
    N, C, H, W = x.shape
    OC = conv_w.shape[0]
    Hp, Wp = H // 3, W // 3
    xp = jnp.pad(x, ((0, 0), (0, 0), (1, 1), (1, 1)))
    y = jnp.zeros((N, OC, H, W), jnp.float32)
    for dy in range(3):
        for dx in range(3):
            y = y + jnp.einsum("nchw,oc->nohw", xp[:, :, dy:dy + H, dx:dx + W],
                               conv_w[:, :, dy, dx],
                               precision=jax.lax.Precision.HIGHEST)
    y = jnp.maximum(y + conv_b[None, :, None, None], 0.0)
    y = y[:, :, :Hp * 3, :Wp * 3]
    pooled = y.reshape(N, OC, Hp, 3, Wp, 3).mean(axis=(3, 5))
    feat = pooled.reshape(N, -1)
    return jnp.dot(feat, lin_w.T, precision=jax.lax.Precision.HIGHEST) + lin_b[None, :]


def init_params(key, in_channels, inputsize):
    """Deterministic synthetic parameters matching the module's shapes."""
    width = inputsize[0] // 3
    height = inputsize[1] // 3
    feat = 32 * width * height
    k1, k2, k3, k4 = jax.random.split(key, 4)
    fan_conv = in_channels * 9
    bnd_c = 1.0 / jnp.sqrt(fan_conv)
    bnd_l = 1.0 / jnp.sqrt(feat)
    return {
        "conv_w": jax.random.uniform(k1, (32, in_channels, 3, 3), jnp.float32, -bnd_c, bnd_c),
        "conv_b": jax.random.uniform(k2, (32,), jnp.float32, -bnd_c, bnd_c),
        "lin_w": jax.random.uniform(k3, (5, feat), jnp.float32, -bnd_l, bnd_l),
        "lin_b": jax.random.uniform(k4, (5,), jnp.float32, -bnd_l, bnd_l),
    }


if __name__ == "__main__":
    key = jax.random.PRNGKey(0)
    kx, kp = jax.random.split(key)

    N, C, H, W = 2, 4, 16, 16            # pooled 5x5 -> feat 32*25 = 800
    x = jax.random.normal(kx, (N, C, H, W), jnp.float32)
    params = init_params(kp, C, (H, W))

    fwd = jax.jit(my_dil_conv_net_forward)
    out = jax.block_until_ready(fwd(x, params))
    assert out.shape == (N, 5) and out.dtype == jnp.float32

    ref = jax.block_until_ready(reference_forward(x, params))
    # bf16 conv operands (f32 accumulation) -> slightly loosened tolerance.
    if not jnp.allclose(out, ref, atol=5e-2, rtol=5e-2):
        max_err = float(jnp.max(jnp.abs(out - ref)))
        raise AssertionError(f"kernel/reference mismatch, max abs err={max_err}")

    print("KERNEL_OK")
</pallas_src>

<mosaic_0001>
module attributes {stable_mosaic.version = 11 : i64} {
  func.func @kernel(%arg0: i32, %arg1: memref<1x4x324xbf16, #tpu.memory_space<vmem>>, %arg2: memref<32x36xbf16, #tpu.memory_space<vmem>>, %arg3: memref<32x1xf32, #tpu.memory_space<vmem>>, %arg4: memref<5x32x286xf32, #tpu.memory_space<vmem>>, %arg5: memref<1x5xf32, #tpu.memory_space<vmem>>, %arg6: memref<1x1x5xf32, #tpu.memory_space<vmem>>) attributes {dimension_semantics = [#tpu.dimension_semantics<parallel>], iteration_bounds = array<i64: 2>, scalar_prefetch = 0 : i64, scratch_operands = 0 : i64, tpu.core_type = #tpu.core_type<tc>, window_params = [{transform_indices = @transform_0, window_bounds = array<i64: 1, 4, 324>}, {pipeline_mode = #tpu.pipeline_mode<synchronous>, transform_indices = @transform_1, window_bounds = array<i64: 32, 36>}, {pipeline_mode = #tpu.pipeline_mode<synchronous>, transform_indices = @transform_2, window_bounds = array<i64: 32, 1>}, {pipeline_mode = #tpu.pipeline_mode<synchronous>, transform_indices = @transform_3, window_bounds = array<i64: 5, 32, 286>}, {pipeline_mode = #tpu.pipeline_mode<synchronous>, transform_indices = @transform_4, window_bounds = array<i64: 1, 5>}, {transform_indices = @transform_5, window_bounds = array<i64: 1, 1, 5>}]} {
    %c0 = arith.constant 0 : index
    %c0_0 = arith.constant 0 : index
    %0 = vector.load %arg2[%c0, %c0_0] : memref<32x36xbf16, #tpu.memory_space<vmem>>, vector<32x36xbf16>
    %c0_1 = arith.constant 0 : index
    %c0_2 = arith.constant 0 : index
    %1 = vector.load %arg3[%c0_1, %c0_2] : memref<32x1xf32, #tpu.memory_space<vmem>>, vector<32x1xf32>
    %c0_3 = arith.constant 0 : index
    %c0_4 = arith.constant 0 : index
    %2 = vector.load %arg5[%c0_3, %c0_4] : memref<1x5xf32, #tpu.memory_space<vmem>>, vector<1x5xf32>
    %3 = tpu.iota {dimensions = array<i32: 1>} : vector<1x5xi32>
    %c0_5 = arith.constant 0 : index
    %c0_6 = arith.constant 0 : index
    %c0_7 = arith.constant 0 : index
    %4 = vector.load %arg1[%c0_5, %c0_6, %c0_7] : memref<1x4x324xbf16, #tpu.memory_space<vmem>>, vector<1x4x286xbf16>
    %5 = vector.shape_cast %4 : vector<1x4x286xbf16> to vector<4x286xbf16>
    %c0_8 = arith.constant 0 : index
    %c0_9 = arith.constant 0 : index
    %c1 = arith.constant 1 : index
    %6 = vector.load %arg1[%c0_8, %c0_9, %c1] : memref<1x4x324xbf16, #tpu.memory_space<vmem>>, vector<1x4x286xbf16>
    %7 = vector.shape_cast %6 : vector<1x4x286xbf16> to vector<4x286xbf16>
    %c0_10 = arith.constant 0 : index
    %c0_11 = arith.constant 0 : index
    %c2 = arith.constant 2 : index
    %8 = vector.load %arg1[%c0_10, %c0_11, %c2] : memref<1x4x324xbf16, #tpu.memory_space<vmem>>, vector<1x4x286xbf16>
    %9 = vector.shape_cast %8 : vector<1x4x286xbf16> to vector<4x286xbf16>
    %c0_12 = arith.constant 0 : index
    %c0_13 = arith.constant 0 : index
    %c18 = arith.constant 18 : index
    %10 = vector.load %arg1[%c0_12, %c0_13, %c18] : memref<1x4x324xbf16, #tpu.memory_space<vmem>>, vector<1x4x286xbf16>
    %11 = vector.shape_cast %10 : vector<1x4x286xbf16> to vector<4x286xbf16>
    %c0_14 = arith.constant 0 : index
    %c0_15 = arith.constant 0 : index
    %c19 = arith.constant 19 : index
    %12 = vector.load %arg1[%c0_14, %c0_15, %c19] : memref<1x4x324xbf16, #tpu.memory_space<vmem>>, vector<1x4x286xbf16>
    %13 = vector.shape_cast %12 : vector<1x4x286xbf16> to vector<4x286xbf16>
    %c0_16 = arith.constant 0 : index
    %c0_17 = arith.constant 0 : index
    %c20 = arith.constant 20 : index
    %14 = vector.load %arg1[%c0_16, %c0_17, %c20] : memref<1x4x324xbf16, #tpu.memory_space<vmem>>, vector<1x4x286xbf16>
    %15 = vector.shape_cast %14 : vector<1x4x286xbf16> to vector<4x286xbf16>
    %c0_18 = arith.constant 0 : index
    %c0_19 = arith.constant 0 : index
    %c36 = arith.constant 36 : index
    %16 = vector.load %arg1[%c0_18, %c0_19, %c36] : memref<1x4x324xbf16, #tpu.memory_space<vmem>>, vector<1x4x286xbf16>
    %17 = vector.shape_cast %16 : vector<1x4x286xbf16> to vector<4x286xbf16>
    %c0_20 = arith.constant 0 : index
    %c0_21 = arith.constant 0 : index
    %c37 = arith.constant 37 : index
    %18 = vector.load %arg1[%c0_20, %c0_21, %c37] : memref<1x4x324xbf16, #tpu.memory_space<vmem>>, vector<1x4x286xbf16>
    %19 = vector.shape_cast %18 : vector<1x4x286xbf16> to vector<4x286xbf16>
    %c0_22 = arith.constant 0 : index
    %c0_23 = arith.constant 0 : index
    %c38 = arith.constant 38 : index
    %20 = vector.load %arg1[%c0_22, %c0_23, %c38] : memref<1x4x324xbf16, #tpu.memory_space<vmem>>, vector<1x4x286xbf16>
    %21 = vector.shape_cast %20 : vector<1x4x286xbf16> to vector<4x286xbf16>
    %22 = tpu.concatenate %5, %7, %9, %11, %13, %15, %17, %19, %21 in 0 : vector<4x286xbf16>, vector<4x286xbf16>, vector<4x286xbf16>, vector<4x286xbf16>, vector<4x286xbf16>, vector<4x286xbf16>, vector<4x286xbf16>, vector<4x286xbf16>, vector<4x286xbf16> -> vector<36x286xbf16>
    %cst = arith.constant dense<0.000000e+00> : vector<32x286xf32>
    %23 = tpu.matmul %0, %22, %cst {dimension_numbers = #tpu.dot_dimension_numbers<[1], [0], [0], [1], [0, 0, 1, 1], [], []>} : vector<32x36xbf16>, vector<36x286xbf16>, vector<32x286xf32> -> vector<32x286xf32>
    %24 = vector.broadcast %1 : vector<32x1xf32> to vector<32x286xf32>
    %25 = arith.addf %23, %24 : vector<32x286xf32>
    %cst_24 = arith.constant 0.000000e+00 : f32
    %26 = vector.broadcast %cst_24 : f32 to vector<32x286xf32>
    %27 = arith.maximumf %25, %26 : vector<32x286xf32>
    %c0_25 = arith.constant 0 : index
    %c0_26 = arith.constant 0 : index
    %c0_27 = arith.constant 0 : index
    %28 = vector.load %arg4[%c0_25, %c0_26, %c0_27] : memref<5x32x286xf32, #tpu.memory_space<vmem>>, vector<1x32x286xf32>
    %29 = vector.shape_cast %28 : vector<1x32x286xf32> to vector<32x286xf32>
    %30 = arith.mulf %27, %29 : vector<32x286xf32>
    %cst_28 = arith.constant dense<0.000000e+00> : vector<32xf32>
    %31 = vector.multi_reduction <add>, %30, %cst_28 [1] : vector<32x286xf32> to vector<32xf32>
    %32 = vector.shape_cast %31 : vector<32xf32> to vector<32x1xf32>
    %cst_29 = arith.constant dense<0.000000e+00> : vector<1xf32>
    %33 = vector.multi_reduction <add>, %32, %cst_29 [0] : vector<32x1xf32> to vector<1xf32>
    %34 = vector.shape_cast %33 : vector<1xf32> to vector<1x1xf32>
    %c0_i32 = arith.constant 0 : i32
    %35 = vector.broadcast %c0_i32 : i32 to vector<1x5xi32>
    %36 = arith.cmpi eq, %3, %35 : vector<1x5xi32>
    %37 = arith.extui %36 : vector<1x5xi1> to vector<1x5xi32>
    %38 = arith.sitofp %37 : vector<1x5xi32> to vector<1x5xf32>
    %39 = vector.broadcast %34 : vector<1x1xf32> to vector<1x5xf32>
    %40 = arith.mulf %39, %38 : vector<1x5xf32>
    %41 = arith.addf %2, %40 : vector<1x5xf32>
    %c1_30 = arith.constant 1 : index
    %c0_31 = arith.constant 0 : index
    %c0_32 = arith.constant 0 : index
    %42 = vector.load %arg4[%c1_30, %c0_31, %c0_32] : memref<5x32x286xf32, #tpu.memory_space<vmem>>, vector<1x32x286xf32>
    %43 = vector.shape_cast %42 : vector<1x32x286xf32> to vector<32x286xf32>
    %44 = arith.mulf %27, %43 : vector<32x286xf32>
    %cst_33 = arith.constant dense<0.000000e+00> : vector<32xf32>
    %45 = vector.multi_reduction <add>, %44, %cst_33 [1] : vector<32x286xf32> to vector<32xf32>
    %46 = vector.shape_cast %45 : vector<32xf32> to vector<32x1xf32>
    %cst_34 = arith.constant dense<0.000000e+00> : vector<1xf32>
    %47 = vector.multi_reduction <add>, %46, %cst_34 [0] : vector<32x1xf32> to vector<1xf32>
    %48 = vector.shape_cast %47 : vector<1xf32> to vector<1x1xf32>
    %c1_i32 = arith.constant 1 : i32
    %49 = vector.broadcast %c1_i32 : i32 to vector<1x5xi32>
    %50 = arith.cmpi eq, %3, %49 : vector<1x5xi32>
    %51 = arith.extui %50 : vector<1x5xi1> to vector<1x5xi32>
    %52 = arith.sitofp %51 : vector<1x5xi32> to vector<1x5xf32>
    %53 = vector.broadcast %48 : vector<1x1xf32> to vector<1x5xf32>
    %54 = arith.mulf %53, %52 : vector<1x5xf32>
    %55 = arith.addf %41, %54 : vector<1x5xf32>
    %c2_35 = arith.constant 2 : index
    %c0_36 = arith.constant 0 : index
    %c0_37 = arith.constant 0 : index
    %56 = vector.load %arg4[%c2_35, %c0_36, %c0_37] : memref<5x32x286xf32, #tpu.memory_space<vmem>>, vector<1x32x286xf32>
    %57 = vector.shape_cast %56 : vector<1x32x286xf32> to vector<32x286xf32>
    %58 = arith.mulf %27, %57 : vector<32x286xf32>
    %cst_38 = arith.constant dense<0.000000e+00> : vector<32xf32>
    %59 = vector.multi_reduction <add>, %58, %cst_38 [1] : vector<32x286xf32> to vector<32xf32>
    %60 = vector.shape_cast %59 : vector<32xf32> to vector<32x1xf32>
    %cst_39 = arith.constant dense<0.000000e+00> : vector<1xf32>
    %61 = vector.multi_reduction <add>, %60, %cst_39 [0] : vector<32x1xf32> to vector<1xf32>
    %62 = vector.shape_cast %61 : vector<1xf32> to vector<1x1xf32>
    %c2_i32 = arith.constant 2 : i32
    %63 = vector.broadcast %c2_i32 : i32 to vector<1x5xi32>
    %64 = arith.cmpi eq, %3, %63 : vector<1x5xi32>
    %65 = arith.extui %64 : vector<1x5xi1> to vector<1x5xi32>
    %66 = arith.sitofp %65 : vector<1x5xi32> to vector<1x5xf32>
    %67 = vector.broadcast %62 : vector<1x1xf32> to vector<1x5xf32>
    %68 = arith.mulf %67, %66 : vector<1x5xf32>
    %69 = arith.addf %55, %68 : vector<1x5xf32>
    %c3 = arith.constant 3 : index
    %c0_40 = arith.constant 0 : index
    %c0_41 = arith.constant 0 : index
    %70 = vector.load %arg4[%c3, %c0_40, %c0_41] : memref<5x32x286xf32, #tpu.memory_space<vmem>>, vector<1x32x286xf32>
    %71 = vector.shape_cast %70 : vector<1x32x286xf32> to vector<32x286xf32>
    %72 = arith.mulf %27, %71 : vector<32x286xf32>
    %cst_42 = arith.constant dense<0.000000e+00> : vector<32xf32>
    %73 = vector.multi_reduction <add>, %72, %cst_42 [1] : vector<32x286xf32> to vector<32xf32>
    %74 = vector.shape_cast %73 : vector<32xf32> to vector<32x1xf32>
    %cst_43 = arith.constant dense<0.000000e+00> : vector<1xf32>
    %75 = vector.multi_reduction <add>, %74, %cst_43 [0] : vector<32x1xf32> to vector<1xf32>
    %76 = vector.shape_cast %75 : vector<1xf32> to vector<1x1xf32>
    %c3_i32 = arith.constant 3 : i32
    %77 = vector.broadcast %c3_i32 : i32 to vector<1x5xi32>
    %78 = arith.cmpi eq, %3, %77 : vector<1x5xi32>
    %79 = arith.extui %78 : vector<1x5xi1> to vector<1x5xi32>
    %80 = arith.sitofp %79 : vector<1x5xi32> to vector<1x5xf32>
    %81 = vector.broadcast %76 : vector<1x1xf32> to vector<1x5xf32>
    %82 = arith.mulf %81, %80 : vector<1x5xf32>
    %83 = arith.addf %69, %82 : vector<1x5xf32>
    %c4 = arith.constant 4 : index
    %c0_44 = arith.constant 0 : index
    %c0_45 = arith.constant 0 : index
    %84 = vector.load %arg4[%c4, %c0_44, %c0_45] : memref<5x32x286xf32, #tpu.memory_space<vmem>>, vector<1x32x286xf32>
    %85 = vector.shape_cast %84 : vector<1x32x286xf32> to vector<32x286xf32>
    %86 = arith.mulf %27, %85 : vector<32x286xf32>
    %cst_46 = arith.constant dense<0.000000e+00> : vector<32xf32>
    %87 = vector.multi_reduction <add>, %86, %cst_46 [1] : vector<32x286xf32> to vector<32xf32>
    %88 = vector.shape_cast %87 : vector<32xf32> to vector<32x1xf32>
    %cst_47 = arith.constant dense<0.000000e+00> : vector<1xf32>
    %89 = vector.multi_reduction <add>, %88, %cst_47 [0] : vector<32x1xf32> to vector<1xf32>
    %90 = vector.shape_cast %89 : vector<1xf32> to vector<1x1xf32>
    %c4_i32 = arith.constant 4 : i32
    %91 = vector.broadcast %c4_i32 : i32 to vector<1x5xi32>
    %92 = arith.cmpi eq, %3, %91 : vector<1x5xi32>
    %93 = arith.extui %92 : vector<1x5xi1> to vector<1x5xi32>
    %94 = arith.sitofp %93 : vector<1x5xi32> to vector<1x5xf32>
    %95 = vector.broadcast %90 : vector<1x1xf32> to vector<1x5xf32>
    %96 = arith.mulf %95, %94 : vector<1x5xf32>
    %97 = arith.addf %83, %96 : vector<1x5xf32>
    %c0_48 = arith.constant 0 : index
    %c0_49 = arith.constant 0 : index
    %c0_50 = arith.constant 0 : index
    %98 = vector.load %arg6[%c0_48, %c0_49, %c0_50] : memref<1x1x5xf32, #tpu.memory_space<vmem>>, vector<1x1x5xf32>
    %99 = vector.shape_cast %98 : vector<1x1x5xf32> to vector<1x5xf32>
    %100 = vector.shape_cast %97 : vector<1x5xf32> to vector<1x1x5xf32>
    tpu.vector_store %arg6[%c0_48, %c0_49, %c0_50], %100 {strides = array<i32>} : memref<1x1x5xf32, #tpu.memory_space<vmem>>, vector<1x1x5xf32>,
    return
  }
  func.func @transform_0(%arg0: i32) -> (i32, i32, i32) {
    %c0_i32 = arith.constant 0 : i32
    %c0_i32_0 = arith.constant 0 : i32
    %c0_i32_1 = arith.constant 0 : i32
    return %arg0, %c0_i32, %c0_i32_0 : i32, i32, i32
  }
  func.func @transform_1(%arg0: i32) -> (i32, i32) {
    %c0_i32 = arith.constant 0 : i32
    %c0_i32_0 = arith.constant 0 : i32
    %c0_i32_1 = arith.constant 0 : i32
    return %c0_i32, %c0_i32_0 : i32, i32
  }
  func.func @transform_2(%arg0: i32) -> (i32, i32) {
    %c0_i32 = arith.constant 0 : i32
    %c0_i32_0 = arith.constant 0 : i32
    %c0_i32_1 = arith.constant 0 : i32
    return %c0_i32, %c0_i32_0 : i32, i32
  }
  func.func @transform_3(%arg0: i32) -> (i32, i32, i32) {
    %c0_i32 = arith.constant 0 : i32
    %c0_i32_0 = arith.constant 0 : i32
    %c0_i32_1 = arith.constant 0 : i32
    %c0_i32_2 = arith.constant 0 : i32
    return %c0_i32, %c0_i32_0, %c0_i32_1 : i32, i32, i32
  }
  func.func @transform_4(%arg0: i32) -> (i32, i32) {
    %c0_i32 = arith.constant 0 : i32
    %c0_i32_0 = arith.constant 0 : i32
    %c0_i32_1 = arith.constant 0 : i32
    return %c0_i32, %c0_i32_0 : i32, i32
  }
  func.func @transform_5(%arg0: i32) -> (i32, i32, i32) {
    %c0_i32 = arith.constant 0 : i32
    %c0_i32_0 = arith.constant 0 : i32
    %c0_i32_1 = arith.constant 0 : i32
    return %arg0, %c0_i32, %c0_i32_0 : i32, i32, i32
  }
}

</mosaic_0001>

<llo_original>
// kernel: my_dil_conv_net_forward.1
$region0: #{my_dil_conv_net_forward.1}
  #allocation0 [shape = 'u32[]', space=smem, size = 0x4, offset = 0x4, fixed_abs, tag = 'smem constant byte address 0x4 - core index']
  #allocation1 [shape = 'u32[144,128]{1,0:T(1,128)}', space=vmem, size = 0x12000, scoped, tag = 'internal scratch']
  %s0 = inlined_call_operand.vmem [shape: bf16[2,4,324], index: 0, kind: input, shape index: {}]
  %s1 = inlined_call_operand.vmem [shape: bf16[32,36], index: 1, kind: input, shape index: {}]
  %s2 = inlined_call_operand.vmem [shape: f32[32,1], index: 2, kind: input, shape index: {}]
  %s3 = inlined_call_operand.vmem [shape: f32[5,32,286], index: 3, kind: input, shape index: {}]
  %s4 = inlined_call_operand.vmem [shape: f32[1,5], index: 4, kind: input, shape index: {}]
  %s5 = inlined_call_operand.hbm [shape: f32[2,1,5], index: 5, kind: output, shape index: {}]
  %s6 = sld [smem:[#allocation0]]
  $region53: #{my_dil_conv_net_forward.1} parent=0
    _
  %s8 = ssub.s32 1, %s6
  %s9 = scalar_select 0, %s8, %s6
  $region1: #{my_dil_conv_net_forward.1} parent=0
    #allocation2 [shape = 'u8[1024]{0}', space=vmem, size = 0x400, scoped, tag = 'output window, operand 0']
    #allocation3 [shape = 's32[2]{0}', space=sflag, size = 0x8, scoped, tag = 'scoped memory for my_dil_conv_net_forward.1']
    %10 = vsyncpa [#allocation3], 0
    %s11 = scalar_lea.sflag [#allocation3], 1
    %12 = vsyncpa %s11, 0
    loop: start=0, step=1, limit=4
    $region2: #{my_dil_conv_net_forward.1} parent=1 // loop_pre_header
      _
    $region3: #{my_dil_conv_net_forward.1} parent=1 // loop_header
      %s14 = sphi 0, %s18
      %p15 = scmp.ge.s32.totalorder %s14, 4
      %s24 = sphi 0, %s26
      %s27 = sphi 0, %s24
      %s28 = sphi 0, %s27
      %s44 = sphi 0, %s28
      %s48 = sphi 0, %s48
      %s50 = sphi 0, %s48
      %s51 = sphi 0, %s50
      %s65 = sphi 0, %s51
      %s69 = sphi 0, %s69
      %s71 = sphi 0, %s69
      %s72 = sphi 0, %s71
      %s86 = sphi 0, %s72
      %s90 = sphi 0, %s90
      %s92 = sphi 0, %s90
      %s93 = sphi 0, %s92
      %s107 = sphi 0, %s93
      %s111 = sphi 0, %s111
      %s113 = sphi 0, %s111
      %s114 = sphi 0, %s113
      %s128 = sphi 0, %s114
      %s134 = sphi 0, %s136
      %s137 = sphi 0, %s134
      %s138 = sphi 0, %s137
      %s154 = sphi 0, %s138
    $region4: #{my_dil_conv_net_forward.1} parent=1 // loop_header_branch
      %17 = sbr.rel (%p15) target = $region8
    $region5: #{my_dil_conv_net_forward.1} parent=1 // loop_body
      %s19 = ssub.s32 %s14, 1
      %s20 = ssub.s32 %s14, 2
      %s21 = sadd.s32 %s14, 1
      %s22 = ssub.s32 %s14, %s21
      %p23 = scmp.eq.s32.totalorder %s22, 0
      %s25 = sadd.s32 %s24, 1
      %s26 = scalar_select %p23, %s24, %s25
      %p29 = pneg %p23
      %p30 = scmp.eq.s32.totalorder %s14, 1
      %p31 = por %p29, %p30
      %p32 = scmp.ne.s32.totalorder %s24, %s27
      %p33 = scmp.eq.s32.totalorder %s14, 0
      %p34 = por %p32, %p33
      %p35 = scmp.ne.s32.totalorder %s24, %s27
      %p36 = scmp.eq.s32.totalorder %s19, 1
      %p37 = por %p35, %p36
      %p38 = scmp.ne.s32.totalorder %s27, %s28
      %p39 = scmp.eq.s32.totalorder %s19, 0
      %p40 = por %p38, %p39
      %p41 = scmp.ne.s32.totalorder %s27, %s28
      %p42 = scmp.eq.s32.totalorder %s20, 1
      %p43 = por %p41, %p42
      %p45 = scmp.ne.s32.totalorder %s28, %s44
      %p46 = scmp.eq.s32.totalorder %s20, 0
      %p47 = por %p45, %p46
      %s49 = sadd.s32 %s48, 1
      %p52 = scmp.eq.s32.totalorder %s14, 1
      %p53 = scmp.ne.s32.totalorder %s48, %s50
      %p54 = scmp.eq.s32.totalorder %s14, 0
      %p55 = por %p53, %p54
      %p56 = scmp.ne.s32.totalorder %s48, %s50
      %p57 = scmp.eq.s32.totalorder %s19, 1
      %p58 = por %p56, %p57
      %p59 = scmp.ne.s32.totalorder %s50, %s51
      %p60 = scmp.eq.s32.totalorder %s19, 0
      %p61 = por %p59, %p60
      %p62 = scmp.ne.s32.totalorder %s50, %s51
      %p63 = scmp.eq.s32.totalorder %s20, 1
      %p64 = por %p62, %p63
      %p66 = scmp.ne.s32.totalorder %s51, %s65
      %p67 = scmp.eq.s32.totalorder %s20, 0
      %p68 = por %p66, %p67
      %s70 = sadd.s32 %s69, 1
      %p73 = scmp.eq.s32.totalorder %s14, 1
      %p74 = scmp.ne.s32.totalorder %s69, %s71
      %p75 = scmp.eq.s32.totalorder %s14, 0
      %p76 = por %p74, %p75
      %p77 = scmp.ne.s32.totalorder %s69, %s71
      %p78 = scmp.eq.s32.totalorder %s19, 1
      %p79 = por %p77, %p78
      %p80 = scmp.ne.s32.totalorder %s71, %s72
      %p81 = scmp.eq.s32.totalorder %s19, 0
      %p82 = por %p80, %p81
      %p83 = scmp.ne.s32.totalorder %s71, %s72
      %p84 = scmp.eq.s32.totalorder %s20, 1
      %p85 = por %p83, %p84
      %p87 = scmp.ne.s32.totalorder %s72, %s86
      %p88 = scmp.eq.s32.totalorder %s20, 0
      %p89 = por %p87, %p88
      %s91 = sadd.s32 %s90, 1
      %p94 = scmp.eq.s32.totalorder %s14, 1
      %p95 = scmp.ne.s32.totalorder %s90, %s92
      %p96 = scmp.eq.s32.totalorder %s14, 0
      %p97 = por %p95, %p96
      %p98 = scmp.ne.s32.totalorder %s90, %s92
      %p99 = scmp.eq.s32.totalorder %s19, 1
      %p100 = por %p98, %p99
      %p101 = scmp.ne.s32.totalorder %s92, %s93
      %p102 = scmp.eq.s32.totalorder %s19, 0
      %p103 = por %p101, %p102
      %p104 = scmp.ne.s32.totalorder %s92, %s93
      %p105 = scmp.eq.s32.totalorder %s20, 1
      %p106 = por %p104, %p105
      %p108 = scmp.ne.s32.totalorder %s93, %s107
      %p109 = scmp.eq.s32.totalorder %s20, 0
      %p110 = por %p108, %p109
      %s112 = sadd.s32 %s111, 1
      %p115 = scmp.eq.s32.totalorder %s14, 1
      %p116 = scmp.ne.s32.totalorder %s111, %s113
      %p117 = scmp.eq.s32.totalorder %s14, 0
      %p118 = por %p116, %p117
      %p119 = scmp.ne.s32.totalorder %s111, %s113
      %p120 = scmp.eq.s32.totalorder %s19, 1
      %p121 = por %p119, %p120
      %p122 = scmp.ne.s32.totalorder %s113, %s114
      %p123 = scmp.eq.s32.totalorder %s19, 0
      %p124 = por %p122, %p123
      %p125 = scmp.ne.s32.totalorder %s113, %s114
      %p126 = scmp.eq.s32.totalorder %s20, 1
      %p127 = por %p125, %p126
      %p129 = scmp.ne.s32.totalorder %s114, %s128
      %p130 = scmp.eq.s32.totalorder %s20, 0
      %p131 = por %p129, %p130
      %s132 = ssub.s32 %s14, %s21
      %p133 = scmp.eq.s32.totalorder %s132, 0
      %s135 = sadd.s32 %s134, 1
      %s136 = scalar_select %p133, %s134, %s135
      %p139 = pneg %p133
      %p140 = scmp.eq.s32.totalorder %s14, 1
      %p141 = por %p139, %p140
      %p142 = scmp.ne.s32.totalorder %s134, %s137
      %p143 = scmp.eq.s32.totalorder %s14, 0
      %p144 = por %p142, %p143
      %p145 = scmp.ne.s32.totalorder %s134, %s137
      %p146 = scmp.eq.s32.totalorder %s19, 1
      %p147 = por %p145, %p146
      %p148 = scmp.ne.s32.totalorder %s137, %s138
      %p149 = scmp.eq.s32.totalorder %s19, 0
      %p150 = por %p148, %p149
      %p151 = scmp.ne.s32.totalorder %s137, %s138
      %p152 = scmp.eq.s32.totalorder %s20, 1
      %p153 = por %p151, %p152
      %p155 = scmp.ne.s32.totalorder %s138, %s154
      %p156 = scmp.eq.s32.totalorder %s20, 0
      %p157 = por %p155, %p156
      %p158 = scmp.le.s32.totalorder 1, %s14
      %p159 = scmp.lt.s32.totalorder %s14, 3
      %p160 = pnand %p158, %p159
      %p161 = pneg %p160
      // Predicated region
      $region9: #{my_dil_conv_net_forward.1} parent=5 // pred_check
        _
      $region10: #{my_dil_conv_net_forward.1} parent=5 // pred_check_branch
        %163 = sbr.rel (%p160) target = $region12
      $region11: #{my_dil_conv_net_forward.1} parent=5 // pred_region
        %s164 = ssub.s32 %s14, 1
        // Predicated region
        $region13: #{my_dil_conv_net_forward.1} parent=11 // pred_check
          %p165 = pneg %p61
        $region14: #{my_dil_conv_net_forward.1} parent=11 // pred_check_branch
          %167 = sbr.rel (%p165) target = $region16
        $region15: #{my_dil_conv_net_forward.1} parent=11 // pred_region
          _
        $region16: #{my_dil_conv_net_forward.1} parent=11 // pred_fallthru
          _
        // Predicated region
        $region17: #{my_dil_conv_net_forward.1} parent=11 // pred_check
          %p168 = pneg %p82
        $region18: #{my_dil_conv_net_forward.1} parent=11 // pred_check_branch
          %170 = sbr.rel (%p168) target = $region20
        $region19: #{my_dil_conv_net_forward.1} parent=11 // pred_region
          _
        $region20: #{my_dil_conv_net_forward.1} parent=11 // pred_fallthru
          _
        // Predicated region
        $region21: #{my_dil_conv_net_forward.1} parent=11 // pred_check
          %p171 = pneg %p103
        $region22: #{my_dil_conv_net_forward.1} parent=11 // pred_check_branch
          %173 = sbr.rel (%p171) target = $region24
        $region23: #{my_dil_conv_net_forward.1} parent=11 // pred_region
          _
        $region24: #{my_dil_conv_net_forward.1} parent=11 // pred_fallthru
          _
        // Predicated region
        $region25: #{my_dil_conv_net_forward.1} parent=11 // pred_check
          %p174 = pneg %p124
        $region26: #{my_dil_conv_net_forward.1} parent=11 // pred_check_branch
          %176 = sbr.rel (%p174) target = $region28
        $region27: #{my_dil_conv_net_forward.1} parent=11 // pred_region
          _
        $region28: #{my_dil_conv_net_forward.1} parent=11 // pred_fallthru
          _
      $region12: #{my_dil_conv_net_forward.1} parent=5 // pred_fallthru
        _
      %p177 = scmp.lt.s32.totalorder %s14, 2
      // Predicated region
      $region29: #{my_dil_conv_net_forward.1} parent=5 // pred_check
        %p178 = pneg %p177
      $region30: #{my_dil_conv_net_forward.1} parent=5 // pred_check_branch
        %180 = sbr.rel (%p178) target = $region32
      $region31: #{my_dil_conv_net_forward.1} parent=5 // pred_region
        // Predicated region
        $region33: #{my_dil_conv_net_forward.1} parent=31 // pred_check
          %p181 = pneg %p34
        $region34: #{my_dil_conv_net_forward.1} parent=31 // pred_check_branch
          %183 = sbr.rel (%p181) target = $region36
        $region35: #{my_dil_conv_net_forward.1} parent=31 // pred_region
          %p184 = scmp.lt.s32.totalorder %s14, 1
          %s185 = scalar_select %p184, %s14, 1
          %s186 = smul.addr %s185, 3
          %s187 = smul.addr %s186, 2
          %s188 = scalar_lea.vmem %s0, %s187
        $region36: #{my_dil_conv_net_forward.1} parent=31 // pred_fallthru
          _
      $region32: #{my_dil_conv_net_forward.1} parent=5 // pred_fallthru
        _
      %p189 = scmp.le.s32.totalorder 1, %s14
      %p190 = scmp.lt.s32.totalorder %s14, 3
      %p191 = pnand %p189, %p190
      %p192 = pneg %p191
      // Predicated region
      $region37: #{my_dil_conv_net_forward.1} parent=5 // pred_check
        _
      $region38: #{my_dil_conv_net_forward.1} parent=5 // pred_check_branch
        %194 = sbr.rel (%p191) target = $region40
      $region39: #{my_dil_conv_net_forward.1} parent=5 // pred_region
        %s195 = ssub.s32 %s14, 1
        %p196 = scmp.lt.s32.totalorder %s19, 1
        %s197 = scalar_select %p196, %s19, 1
        %s198 = smul.addr %s197, 3
        %s199 = smul.addr %s198, 2
        %s200 = scalar_lea.vmem %s0, %s199
        %p201 = pneg %p40
        %p202 = pneg %p37
        %p203 = pneg %p61
        %p204 = pneg %p58
        %p205 = pneg %p82
        %p206 = pneg %p79
        %p207 = pneg %p103
        %p208 = pneg %p100
        %p209 = pneg %p124
        %p210 = pneg %p121
        %p211 = pneg %p150
        %p212 = pneg %p147
        %s213 = sand.u32 %s137, 1
        %s214 = scalar_lea.sflag [#allocation3], %s213
        %s215 = sand.u32 %s137, 1
        %s216 = scalar_lea.vmem [#allocation2], %s215
        %p217 = scmp.lt.s32.totalorder %s19, 1
        %s218 = scalar_select %p217, %s19, 1
        %s219 = smul.addr %s218, 3
        %s220 = smul.addr %s219, 2
        %s221 = scalar_lea.vmem %s0, %s220
        %v223 = vld [vmem:[%s1] sm:$0xf]
        %v224 = vld [vmem:[%s1 + $0x4] sm:$0xf]
        %v225 = vld [vmem:[%s1 + $0x8] sm:$0xf]
        %v226 = vld [vmem:[%s1 + $0xc] sm:$0xf]
        %v227 = vld [vmem:[%s2] sm:$0xff]
        %v228 = vld [vmem:[%s2 + $0x8] sm:$0xff]
        %v229 = vld [vmem:[%s2 + $0x10] sm:$0xff]
        %v230 = vld [vmem:[%s2 + $0x18] sm:$0xff]
        %v231 = vld [vmem:[%s4] sm:$0x1]
        %v232 = vlaneseq
        %v233 = vand.u32 %v232, 127
        %v234 = vld [vmem:[%s221] sm:$0x3f]
        %v236 = vcombine.high %v234, %v234
        %v238 = vunpack.c.l.s4 1983009808
        %v239 = vunpack.c.0.s8 %v238
        %v240 = vlaneseq
        %v241 = vshrl.u32 %v240, 7
        %v242 = vsub.s32 %v239, %v241
        %v243 = vrot.slane %v234, %v242
        %v245 = vunpack.c.l.s4 1983009808
        %v246 = vunpack.c.0.s8 %v245
        %v247 = vlaneseq
        %v248 = vshrl.u32 %v247, 7
        %v249 = vsub.s32 %v246, %v248
        %v250 = vrot.slane %v236, %v249
        %v251 = vcombine.high %v243, %v243
        %v252 = vcombine.low %v234, %v234
        %v254 = vunpack.c.l.s4 1983009808
        %v255 = vunpack.c.0.s8 %v254
        %v256 = vlaneseq
        %v257 = vshrl.u32 %v256, 7
        %v258 = vsub.s32 %v255, %v257
        %v259 = vrot.slane %v252, %v258
        %v260 = vcombine.high %v259, %v259
        %261 = vrot.lane.b32.xlu0 %v259, 127
        %v262 = vpop.permute.xlu0 %261
        %263 = vrot.lane.b32.xlu0 %v260, 127
        %v264 = vpop.permute.xlu0 %263
        %265 = vrot.lane.b32.xlu0 %v243, 127
        %v266 = vpop.permute.xlu0 %265
        %vm267 = vcmask 1039360
        %v268 = vsel %vm267, %v262, %v264
        %v269 = vsel %vm267, %v264, %v266
        %v270 = vcombine.low %v243, %v243
        %v271 = vcombine.low %v250, %v250
        %272 = vrot.lane.b32.xlu0 %v270, 126
        %v273 = vpop.permute.xlu0 %272
        %274 = vrot.lane.b32.xlu0 %v243, 126
        %v275 = vpop.permute.xlu0 %274
        %276 = vrot.lane.b32.xlu0 %v271, 126
        %v277 = vpop.permute.xlu0 %276
        %vm278 = vcmask 1031168
        %v279 = vsel %vm278, %v273, %v275
        %v280 = vsel %vm278, %v275, %v277
        %v281 = vcombine.low %v259, %v259
        %282 = vrot.lane.b32.xlu0 %v281, 110
        %v283 = vpop.permute.xlu0 %282
        %284 = vrot.lane.b32.xlu0 %v259, 110
        %v285 = vpop.permute.xlu0 %284
        %286 = vrot.lane.b32.xlu0 %v270, 110
        %v287 = vpop.permute.xlu0 %286
        %vm288 = vcmask 900096
        %v289 = vsel %vm288, %v283, %v285
        %v290 = vsel %vm288, %v285, %v287
        %291 = vrot.lane.b32.xlu0 %v243, 109
        %v292 = vpop.permute.xlu0 %291
        %293 = vrot.lane.b32.xlu0 %v251, 109
        %v294 = vpop.permute.xlu0 %293
        %295 = vrot.lane.b32.xlu0 %v250, 109
        %v296 = vpop.permute.xlu0 %295
        %vm297 = vcmask 891904
        %v298 = vsel %vm297, %v292, %v294
        %v299 = vsel %vm297, %v294, %v296
        %300 = vrot.lane.b32.xlu0 %v259, 108
        %v301 = vpop.permute.xlu0 %300
        %302 = vrot.lane.b32.xlu0 %v260, 108
        %v303 = vpop.permute.xlu0 %302
        %304 = vrot.lane.b32.xlu0 %v243, 108
        %v305 = vpop.permute.xlu0 %304
        %vm306 = vcmask 883712
        %v307 = vsel %vm306, %v301, %v303
        %v308 = vsel %vm306, %v303, %v305
        %309 = vrot.lane.b32.xlu0 %v270, 92
        %v310 = vpop.permute.xlu0 %309
        %311 = vrot.lane.b32.xlu0 %v243, 92
        %v312 = vpop.permute.xlu0 %311
        %313 = vrot.lane.b32.xlu0 %v271, 92
        %v314 = vpop.permute.xlu0 %313
        %vm315 = vcmask 752640
        %v316 = vsel %vm315, %v310, %v312
        %v317 = vsel %vm315, %v312, %v314
        %318 = vrot.lane.b32.xlu0 %v281, 91
        %v319 = vpop.permute.xlu0 %318
        %320 = vrot.lane.b32.xlu0 %v259, 91
        %v321 = vpop.permute.xlu0 %320
        %322 = vrot.lane.b32.xlu0 %v270, 91
        %v323 = vpop.permute.xlu0 %322
        %vm324 = vcmask 744448
        %v325 = vsel %vm324, %v319, %v321
        %v326 = vsel %vm324, %v321, %v323
        %327 = vrot.lane.b32.xlu0 %v243, 90
        %v328 = vpop.permute.xlu0 %327
        %329 = vrot.lane.b32.xlu0 %v251, 90
        %v330 = vpop.permute.xlu0 %329
        %331 = vrot.lane.b32.xlu0 %v250, 90
        %v332 = vpop.permute.xlu0 %331
        %vm333 = vcmask 736256
        %v334 = vsel %vm333, %v328, %v330
        %v335 = vsel %vm333, %v330, %v332
        %vm336 = vcmask 1041408
        %v339 = vsel %vm336, %v243, %v268
        %v342 = vsel %vm336, %v251, %v269
        %v345 = vsel %vm336, %v250, %v266
        %vm346 = vcmask 1043456
        %v348 = vsel %vm346, %v339, %v279
        %v350 = vsel %vm346, %v342, %v280
        %v352 = vsel %vm346, %v345, %v277
        %vm353 = vcmask 1045504
        %v355 = vsel %vm353, %v348, %v289
        %v358 = vsel %vm353, %v350, %v290
        %v361 = vsel %vm353, %v352, %v287
        %v365 = vsel %vm336, %v298, %v307
        %v368 = vsel %vm336, %v299, %v308
        %v371 = vsel %vm336, %v296, %v305
        %v373 = vsel %vm346, %v365, %v316
        %v375 = vsel %vm346, %v368, %v317
        %v377 = vsel %vm346, %v371, %v314
        %v379 = vsel %vm353, %v373, %v325
        %v382 = vsel %vm353, %v375, %v326
        %v385 = vsel %vm353, %v377, %v323
        %388 = vset.pattern.permute.xlu0 0
        %389 = vperm.xlu0 %388, %v227
        %v390 = vpop.permute.xlu0 %389
        %393 = vset.pattern.permute.xlu0 0
        %394 = vperm.xlu0 %393, %v228
        %v395 = vpop.permute.xlu0 %394
        %398 = vset.pattern.permute.xlu0 0
        %399 = vperm.xlu0 %398, %v229
        %v400 = vpop.permute.xlu0 %399
        %403 = vset.pattern.permute.xlu0 0
        %404 = vperm.xlu0 %403, %v230
        %v405 = vpop.permute.xlu0 %404
        %v411 = vunpack.c.l.b16 %v223
        %v412 = vunpack.c.l.b16 %v224
        %v413 = vunpack.c.l.b16 %v225
        %v414 = vunpack.c.l.b16 %v226
        %v415 = vpack.c.b16 %v412, %v411
        %v416 = vpack.c.b16 %v414, %v413
        %vm417 = vcmask 293888
        %v419 = vsel %vm417, %v415, 0
        %v422 = vsel %vm417, %v416, 0
        %v425 = vsel %vm336, %v334, 0
        %v428 = vsel %vm336, %v335, 0
        %v431 = vsel %vm336, %v332, 0
        %433 = vmatprep.subr.bf16.mxu0 0
        %434 = vmatpush1.bf16.msra.mxu0 0
        %435 = vmatprep.subr.bf16.mxu0 0
        %436 = vmatpush1.bf16.msra.mxu0 0
        %437 = vmatprep.subr.bf16.mxu0 0
        %438 = vmatpush1.bf16.msra.mxu0 0
        %439 = vmatprep.subr.bf16.mxu0 0
        %440 = vmatpush1.bf16.msra.mxu0 0
        %441 = vmatprep.subr.bf16.mxu0 0
        %442 = vmatpush1.bf16.msra.mxu0 0
        %443 = vmatprep.subr.bf16.mxu0 %v428
        %444 = vmatpush1.bf16.msra.mxu0 %v425
        %445 = vmatprep.subr.bf16.mxu0 %v382
        %446 = vmatpush1.bf16.msra.mxu0 %v379
        %447 = vmatprep.subr.bf16.mxu0 %v358
        %448 = vmatpush1.bf16.msra.mxu0 %v355
        %449 = vmatprep.subr.bf16.mxu0 0
        %450 = vmatpush2.bf16.msra.mxu0 0
        %451 = vmatprep.subr.bf16.mxu0 0
        %452 = vmatpush2.bf16.msra.mxu0 0
        %453 = vmatprep.subr.bf16.mxu0 0
        %454 = vmatpush2.bf16.msra.mxu0 0
        %455 = vmatprep.subr.bf16.mxu0 0
        %456 = vmatpush2.bf16.msra.mxu0 0
        %457 = vmatprep.subr.bf16.mxu0 0
        %458 = vmatpush2.bf16.msra.mxu0 0
        %459 = vmatprep.subr.bf16.mxu0 0
        %460 = vmatpush2.bf16.msra.mxu0 0
        %461 = vmatprep.subr.bf16.mxu0 0
        %462 = vmatpush2.bf16.msra.mxu0 0
        %463 = vmatprep.subr.bf16.mxu0 0
        %464 = vmatpush2.bf16.msra.mxu0 0
        %465 = vmatprep.mubr.bf16.mxu0 0
        %466 = vmatmul.mubr.bf16.gmra.mxu0 %v419
        %v467 = vpop.f32.mrf.mxu0
        %v468 = vadd.f32 %v390, %v467
        %v469 = vpop.f32.mrf.mxu0
        %v470 = vadd.f32 %v390, %v469
        %v471 = vpop.f32.mrf.mxu0
        %v472 = vadd.f32 %v395, %v471
        %v473 = vpop.f32.mrf.mxu0
        %v474 = vadd.f32 %v395, %v473
        %475 = vmatprep.mubr.bf16.mxu0 0
        %476 = vmatmul.mubr.bf16.gmra.mxu0 %v422
        %v477 = vpop.f32.mrf.mxu0
        %v478 = vadd.f32 %v400, %v477
        %v479 = vpop.f32.mrf.mxu0
        %v480 = vadd.f32 %v400, %v479
        %v481 = vpop.f32.mrf.mxu0
        %v482 = vadd.f32 %v405, %v481
        %v483 = vpop.f32.mrf.mxu0
        %v484 = vadd.f32 %v405, %v483
        %485 = vdwg.mxu0
        %486 = vmatprep.subr.bf16.mxu0 0
        %487 = vmatpush1.bf16.msra.mxu0 0
        %488 = vmatprep.subr.bf16.mxu0 0
        %489 = vmatpush1.bf16.msra.mxu0 0
        %490 = vmatprep.subr.bf16.mxu0 0
        %491 = vmatpush1.bf16.msra.mxu0 0
        %492 = vmatprep.subr.bf16.mxu0 0
        %493 = vmatpush1.bf16.msra.mxu0 0
        %494 = vmatprep.subr.bf16.mxu0 0
        %495 = vmatpush1.bf16.msra.mxu0 0
        %496 = vmatprep.subr.bf16.mxu0 0
        %497 = vmatpush1.bf16.msra.mxu0 %v431
        %498 = vmatprep.subr.bf16.mxu0 0
        %499 = vmatpush1.bf16.msra.mxu0 %v385
        %500 = vmatprep.subr.bf16.mxu0 0
        %501 = vmatpush1.bf16.msra.mxu0 %v361
        %502 = vmatprep.subr.bf16.mxu0 0
        %503 = vmatpush2.bf16.msra.mxu0 0
        %504 = vmatprep.subr.bf16.mxu0 0
        %505 = vmatpush2.bf16.msra.mxu0 0
        %506 = vmatprep.subr.bf16.mxu0 0
        %507 = vmatpush2.bf16.msra.mxu0 0
        %508 = vmatprep.subr.bf16.mxu0 0
        %509 = vmatpush2.bf16.msra.mxu0 0
        %510 = vmatprep.subr.bf16.mxu0 0
        %511 = vmatpush2.bf16.msra.mxu0 0
        %512 = vmatprep.subr.bf16.mxu0 0
        %513 = vmatpush2.bf16.msra.mxu0 0
        %514 = vmatprep.subr.bf16.mxu0 0
        %515 = vmatpush2.bf16.msra.mxu0 0
        %516 = vmatprep.subr.bf16.mxu0 0
        %517 = vmatpush2.bf16.msra.mxu0 0
        %518 = vmatprep.mubr.bf16.mxu0 0
        %519 = vmatmul.mubr.bf16.gmra.mxu0 %v419
        %v520 = vpop.f32.mrf.mxu0
        %v521 = vadd.f32 %v390, %v520
        %v522 = vpop.f32.mrf.mxu0
        %v523 = vpop.f32.mrf.mxu0
        %v524 = vadd.f32 %v395, %v523
        %v525 = vpop.f32.mrf.mxu0
        %526 = vmatprep.mubr.bf16.mxu0 0
        %527 = vmatmul.mubr.bf16.gmra.mxu0 %v422
        %v528 = vpop.f32.mrf.mxu0
        %v529 = vadd.f32 %v400, %v528
        %v530 = vpop.f32.mrf.mxu0
        %v531 = vpop.f32.mrf.mxu0
        %v532 = vadd.f32 %v405, %v531
        %v533 = vpop.f32.mrf.mxu0
        %534 = vdwg.mxu0
        %v535 = vmax.f32 %v468, 0.0
        %v536 = vmax.f32 %v470, 0.0
        %v537 = vmax.f32 %v521, 0.0
        %v538 = vmax.f32 %v472, 0.0
        %v539 = vmax.f32 %v474, 0.0
        %v540 = vmax.f32 %v524, 0.0
        %v541 = vmax.f32 %v478, 0.0
        %v542 = vmax.f32 %v480, 0.0
        %v543 = vmax.f32 %v529, 0.0
        %v544 = vmax.f32 %v482, 0.0
        %v545 = vmax.f32 %v484, 0.0
        %v546 = vmax.f32 %v532, 0.0
        %v547 = vld [vmem:[%s3] sm:$0xff]
        %v548 = vld [vmem:[%s3 + $0x8] sm:$0xff]
        %v549 = vld [vmem:[%s3 + $0x10] sm:$0xff]
        %v550 = vld [vmem:[%s3 + $0x18] sm:$0xff]
        %v551 = vld [vmem:[%s3 + $0x20] sm:$0xff]
        %v552 = vld [vmem:[%s3 + $0x28] sm:$0xff]
        %v553 = vld [vmem:[%s3 + $0x30] sm:$0xff]
        %v554 = vld [vmem:[%s3 + $0x38] sm:$0xff]
        %v555 = vld [vmem:[%s3 + $0x40] sm:$0xff]
        %v556 = vld [vmem:[%s3 + $0x48] sm:$0xff]
        %v557 = vld [vmem:[%s3 + $0x50] sm:$0xff]
        %v558 = vld [vmem:[%s3 + $0x58] sm:$0xff]
        %v559 = vmul.f32 %v535, %v547
        %v560 = vmul.f32 %v536, %v548
        %v561 = vmul.f32 %v537, %v549
        %v562 = vmul.f32 %v538, %v550
        %v563 = vmul.f32 %v539, %v551
        %v564 = vmul.f32 %v540, %v552
        %v565 = vmul.f32 %v541, %v553
        %v566 = vmul.f32 %v542, %v554
        %v567 = vmul.f32 %v543, %v555
        %v568 = vmul.f32 %v544, %v556
        %v569 = vmul.f32 %v545, %v557
        %v570 = vmul.f32 %v546, %v558
        %v571 = vadd.f32 %v559, %v560
        %vm572 = vcmask 244736
        %v573 = vsel %vm572, %v561, 0.0
        %v574 = vadd.f32 %v571, %v573
        %575 = vadd.xlane.f32.xlu0 %v574
        %v576 = vpop.xlane.xlu0 %575
        %v577 = vadd.f32 %v562, %v563
        %v578 = vsel %vm572, %v564, 0.0
        %v579 = vadd.f32 %v577, %v578
        %580 = vadd.xlane.f32.xlu0 %v579
        %v581 = vpop.xlane.xlu0 %580
        %v582 = vadd.f32 %v565, %v566
        %v583 = vsel %vm572, %v567, 0.0
        %v584 = vadd.f32 %v582, %v583
        %585 = vadd.xlane.f32.xlu0 %v584
        %v586 = vpop.xlane.xlu0 %585
        %v587 = vadd.f32 %v568, %v569
        %v588 = vsel %vm572, %v570, 0.0
        %v589 = vadd.f32 %v587, %v588
        %590 = vadd.xlane.f32.xlu0 %v589
        %v591 = vpop.xlane.xlu0 %590
        %v592 = vadd.f32 %v576, %v581
        %v593 = vadd.f32 %v592, %v586
        %v594 = vadd.f32 %v593, %v591
        %v595 = vrot.slane %v594, 4
        %v596 = vadd.f32 %v594, %v595
        %v597 = vrot.slane %v596, 2
        %v598 = vadd.f32 %v596, %v597
        %v599 = vrot.slane %v598, 1
        %v600 = vadd.f32 %v598, %v599
        %vm601 = vcmp.eq.s32.totalorder %v233, 0
        %v602 = vsel %vm601, 1, 0
        %v603 = vcvt.s32.f32 %v602
        %v604 = vmul.f32 %v600, %v603
        %v605 = vadd.f32 %v231, %v604
        %s606 = scalar_lea.vmem %s3, 96
        %v607 = vld [vmem:[%s606] sm:$0xff]
        %v608 = vld [vmem:[%s606 + $0x8] sm:$0xff]
        %v609 = vld [vmem:[%s606 + $0x10] sm:$0xff]
        %v610 = vld [vmem:[%s606 + $0x18] sm:$0xff]
        %v611 = vld [vmem:[%s606 + $0x20] sm:$0xff]
        %v612 = vld [vmem:[%s606 + $0x28] sm:$0xff]
        %v613 = vld [vmem:[%s606 + $0x30] sm:$0xff]
        %v614 = vld [vmem:[%s606 + $0x38] sm:$0xff]
        %v615 = vld [vmem:[%s606 + $0x40] sm:$0xff]
        %v616 = vld [vmem:[%s606 + $0x48] sm:$0xff]
        %v617 = vld [vmem:[%s606 + $0x50] sm:$0xff]
        %v618 = vld [vmem:[%s606 + $0x58] sm:$0xff]
        %v619 = vmul.f32 %v535, %v607
        %v620 = vmul.f32 %v536, %v608
        %v621 = vmul.f32 %v537, %v609
        %v622 = vmul.f32 %v538, %v610
        %v623 = vmul.f32 %v539, %v611
        %v624 = vmul.f32 %v540, %v612
        %v625 = vmul.f32 %v541, %v613
        %v626 = vmul.f32 %v542, %v614
        %v627 = vmul.f32 %v543, %v615
        %v628 = vmul.f32 %v544, %v616
        %v629 = vmul.f32 %v545, %v617
        %v630 = vmul.f32 %v546, %v618
        %v631 = vadd.f32 %v619, %v620
        %v632 = vsel %vm572, %v621, 0.0
        %v633 = vadd.f32 %v631, %v632
        %634 = vadd.xlane.f32.xlu0 %v633
        %v635 = vpop.xlane.xlu0 %634
        %v636 = vadd.f32 %v622, %v623
        %v637 = vsel %vm572, %v624, 0.0
        %v638 = vadd.f32 %v636, %v637
        %639 = vadd.xlane.f32.xlu0 %v638
        %v640 = vpop.xlane.xlu0 %639
        %v641 = vadd.f32 %v625, %v626
        %v642 = vsel %vm572, %v627, 0.0
        %v643 = vadd.f32 %v641, %v642
        %644 = vadd.xlane.f32.xlu0 %v643
        %v645 = vpop.xlane.xlu0 %644
        %v646 = vadd.f32 %v628, %v629
        %v647 = vsel %vm572, %v630, 0.0
        %v648 = vadd.f32 %v646, %v647
        %649 = vadd.xlane.f32.xlu0 %v648
        %v650 = vpop.xlane.xlu0 %649
        %v651 = vadd.f32 %v635, %v640
        %v652 = vadd.f32 %v651, %v645
        %v653 = vadd.f32 %v652, %v650
        %v654 = vrot.slane %v653, 4
        %v655 = vadd.f32 %v653, %v654
        %v656 = vrot.slane %v655, 2
        %v657 = vadd.f32 %v655, %v656
        %v658 = vrot.slane %v657, 1
        %v659 = vadd.f32 %v657, %v658
        %vm660 = vcmp.eq.s32.totalorder %v233, 1
        %v661 = vsel %vm660, 1, 0
        %v662 = vcvt.s32.f32 %v661
        %v663 = vmul.f32 %v659, %v662
        %v664 = vadd.f32 %v605, %v663
        %s665 = scalar_lea.vmem %s3, 192
        %v666 = vld [vmem:[%s665] sm:$0xff]
        %v667 = vld [vmem:[%s665 + $0x8] sm:$0xff]
        %v668 = vld [vmem:[%s665 + $0x10] sm:$0xff]
        %v669 = vld [vmem:[%s665 + $0x18] sm:$0xff]
        %v670 = vld [vmem:[%s665 + $0x20] sm:$0xff]
        %v671 = vld [vmem:[%s665 + $0x28] sm:$0xff]
        %v672 = vld [vmem:[%s665 + $0x30] sm:$0xff]
        %v673 = vld [vmem:[%s665 + $0x38] sm:$0xff]
        %v674 = vld [vmem:[%s665 + $0x40] sm:$0xff]
        %v675 = vld [vmem:[%s665 + $0x48] sm:$0xff]
        %v676 = vld [vmem:[%s665 + $0x50] sm:$0xff]
        %v677 = vld [vmem:[%s665 + $0x58] sm:$0xff]
        %v678 = vmul.f32 %v535, %v666
        %v679 = vmul.f32 %v536, %v667
        %v680 = vmul.f32 %v537, %v668
        %v681 = vmul.f32 %v538, %v669
        %v682 = vmul.f32 %v539, %v670
        %v683 = vmul.f32 %v540, %v671
        %v684 = vmul.f32 %v541, %v672
        %v685 = vmul.f32 %v542, %v673
        %v686 = vmul.f32 %v543, %v674
        %v687 = vmul.f32 %v544, %v675
        %v688 = vmul.f32 %v545, %v676
        %v689 = vmul.f32 %v546, %v677
        %v690 = vadd.f32 %v678, %v679
        %v691 = vsel %vm572, %v680, 0.0
        %v692 = vadd.f32 %v690, %v691
        %693 = vadd.xlane.f32.xlu0 %v692
        %v694 = vpop.xlane.xlu0 %693
        %v695 = vadd.f32 %v681, %v682
        %v696 = vsel %vm572, %v683, 0.0
        %v697 = vadd.f32 %v695, %v696
        %698 = vadd.xlane.f32.xlu0 %v697
        %v699 = vpop.xlane.xlu0 %698
        %v700 = vadd.f32 %v684, %v685
        %v701 = vsel %vm572, %v686, 0.0
        %v702 = vadd.f32 %v700, %v701
        %703 = vadd.xlane.f32.xlu0 %v702
        %v704 = vpop.xlane.xlu0 %703
        %v705 = vadd.f32 %v687, %v688
        %v706 = vsel %vm572, %v689, 0.0
        %v707 = vadd.f32 %v705, %v706
        %708 = vadd.xlane.f32.xlu0 %v707
        %v709 = vpop.xlane.xlu0 %708
        %v710 = vadd.f32 %v694, %v699
        %v711 = vadd.f32 %v710, %v704
        %v712 = vadd.f32 %v711, %v709
        %v713 = vrot.slane %v712, 4
        %v714 = vadd.f32 %v712, %v713
        %v715 = vrot.slane %v714, 2
        %v716 = vadd.f32 %v714, %v715
        %v717 = vrot.slane %v716, 1
        %v718 = vadd.f32 %v716, %v717
        %vm719 = vcmp.eq.s32.totalorder %v233, 2
        %v720 = vsel %vm719, 1, 0
        %v721 = vcvt.s32.f32 %v720
        %v722 = vmul.f32 %v718, %v721
        %v723 = vadd.f32 %v664, %v722
        %s724 = scalar_lea.vmem %s3, 288
        %v725 = vld [vmem:[%s724] sm:$0xff]
        %v726 = vld [vmem:[%s724 + $0x8] sm:$0xff]
        %v727 = vld [vmem:[%s724 + $0x10] sm:$0xff]
        %v728 = vld [vmem:[%s724 + $0x18] sm:$0xff]
        %v729 = vld [vmem:[%s724 + $0x20] sm:$0xff]
        %v730 = vld [vmem:[%s724 + $0x28] sm:$0xff]
        %v731 = vld [vmem:[%s724 + $0x30] sm:$0xff]
        %v732 = vld [vmem:[%s724 + $0x38] sm:$0xff]
        %v733 = vld [vmem:[%s724 + $0x40] sm:$0xff]
        %v734 = vld [vmem:[%s724 + $0x48] sm:$0xff]
        %v735 = vld [vmem:[%s724 + $0x50] sm:$0xff]
        %v736 = vld [vmem:[%s724 + $0x58] sm:$0xff]
        %v737 = vmul.f32 %v535, %v725
        %v738 = vmul.f32 %v536, %v726
        %v739 = vmul.f32 %v537, %v727
        %v740 = vmul.f32 %v538, %v728
        %v741 = vmul.f32 %v539, %v729
        %v742 = vmul.f32 %v540, %v730
        %v743 = vmul.f32 %v541, %v731
        %v744 = vmul.f32 %v542, %v732
        %v745 = vmul.f32 %v543, %v733
        %v746 = vmul.f32 %v544, %v734
        %v747 = vmul.f32 %v545, %v735
        %v748 = vmul.f32 %v546, %v736
        %v749 = vadd.f32 %v737, %v738
        %v750 = vsel %vm572, %v739, 0.0
        %v751 = vadd.f32 %v749, %v750
        %752 = vadd.xlane.f32.xlu0 %v751
        %v753 = vpop.xlane.xlu0 %752
        %v754 = vadd.f32 %v740, %v741
        %v755 = vsel %vm572, %v742, 0.0
        %v756 = vadd.f32 %v754, %v755
        %757 = vadd.xlane.f32.xlu0 %v756
        %v758 = vpop.xlane.xlu0 %757
        %v759 = vadd.f32 %v743, %v744
        %v760 = vsel %vm572, %v745, 0.0
        %v761 = vadd.f32 %v759, %v760
        %762 = vadd.xlane.f32.xlu0 %v761
        %v763 = vpop.xlane.xlu0 %762
        %v764 = vadd.f32 %v746, %v747
        %v765 = vsel %vm572, %v748, 0.0
        %v766 = vadd.f32 %v764, %v765
        %767 = vadd.xlane.f32.xlu0 %v766
        %v768 = vpop.xlane.xlu0 %767
        %v769 = vadd.f32 %v753, %v758
        %v770 = vadd.f32 %v769, %v763
        %v771 = vadd.f32 %v770, %v768
        %v772 = vrot.slane %v771, 4
        %v773 = vadd.f32 %v771, %v772
        %v774 = vrot.slane %v773, 2
        %v775 = vadd.f32 %v773, %v774
        %v776 = vrot.slane %v775, 1
        %v777 = vadd.f32 %v775, %v776
        %vm778 = vcmp.eq.s32.totalorder %v233, 3
        %v779 = vsel %vm778, 1, 0
        %v780 = vcvt.s32.f32 %v779
        %v781 = vmul.f32 %v777, %v780
        %v782 = vadd.f32 %v723, %v781
        %s783 = scalar_lea.vmem %s3, 384
        %v784 = vld [vmem:[%s783] sm:$0xff]
        %v785 = vld [vmem:[%s783 + $0x8] sm:$0xff]
        %v786 = vld [vmem:[%s783 + $0x10] sm:$0xff]
        %v787 = vld [vmem:[%s783 + $0x18] sm:$0xff]
        %v788 = vld [vmem:[%s783 + $0x20] sm:$0xff]
        %v789 = vld [vmem:[%s783 + $0x28] sm:$0xff]
        %v790 = vld [vmem:[%s783 + $0x30] sm:$0xff]
        %v791 = vld [vmem:[%s783 + $0x38] sm:$0xff]
        %v792 = vld [vmem:[%s783 + $0x40] sm:$0xff]
        %v793 = vld [vmem:[%s783 + $0x48] sm:$0xff]
        %v794 = vld [vmem:[%s783 + $0x50] sm:$0xff]
        %v795 = vld [vmem:[%s783 + $0x58] sm:$0xff]
        %v796 = vmul.f32 %v535, %v784
        %v797 = vmul.f32 %v536, %v785
        %v798 = vmul.f32 %v537, %v786
        %v799 = vmul.f32 %v538, %v787
        %v800 = vmul.f32 %v539, %v788
        %v801 = vmul.f32 %v540, %v789
        %v802 = vmul.f32 %v541, %v790
        %v803 = vmul.f32 %v542, %v791
        %v804 = vmul.f32 %v543, %v792
        %v805 = vmul.f32 %v544, %v793
        %v806 = vmul.f32 %v545, %v794
        %v807 = vmul.f32 %v546, %v795
        %v808 = vadd.f32 %v796, %v797
        %v809 = vsel %vm572, %v798, 0.0
        %v810 = vadd.f32 %v808, %v809
        %811 = vadd.xlane.f32.xlu0 %v810
        %v812 = vpop.xlane.xlu0 %811
        %v813 = vadd.f32 %v799, %v800
        %v814 = vsel %vm572, %v801, 0.0
        %v815 = vadd.f32 %v813, %v814
        %816 = vadd.xlane.f32.xlu0 %v815
        %v817 = vpop.xlane.xlu0 %816
        %v818 = vadd.f32 %v802, %v803
        %v819 = vsel %vm572, %v804, 0.0
        %v820 = vadd.f32 %v818, %v819
        %821 = vadd.xlane.f32.xlu0 %v820
        %v822 = vpop.xlane.xlu0 %821
        %v823 = vadd.f32 %v805, %v806
        %v824 = vsel %vm572, %v807, 0.0
        %v825 = vadd.f32 %v823, %v824
        %826 = vadd.xlane.f32.xlu0 %v825
        %v827 = vpop.xlane.xlu0 %826
        %v828 = vadd.f32 %v812, %v817
        %v829 = vadd.f32 %v828, %v822
        %v830 = vadd.f32 %v829, %v827
        %v831 = vrot.slane %v830, 4
        %v832 = vadd.f32 %v830, %v831
        %v833 = vrot.slane %v832, 2
        %v834 = vadd.f32 %v832, %v833
        %v835 = vrot.slane %v834, 1
        %v836 = vadd.f32 %v834, %v835
        %vm837 = vcmp.eq.s32.totalorder %v233, 4
        %v838 = vsel %vm837, 1, 0
        %v839 = vcvt.s32.f32 %v838
        %v840 = vmul.f32 %v836, %v839
        %v841 = vadd.f32 %v782, %v840
        %vm842 = vcmask 32768
        %843 = vst.msk [vmem:[%s216] sm:$0x1] %vm842, %v841
        %s844 = sand.u32 %s137, 1
        %s845 = scalar_lea.sflag [#allocation3], %s844
        %s846 = sand.u32 %s137, 1
        %s847 = scalar_lea.vmem [#allocation2], %s846
        // Predicated region
        $region41: #{my_dil_conv_net_forward.1} parent=39 // pred_check
          %p848 = pneg %p147
        $region42: #{my_dil_conv_net_forward.1} parent=39 // pred_check_branch
          %850 = sbr.rel (%p848) target = $region44
        $region43: #{my_dil_conv_net_forward.1} parent=39 // pred_region
          %s852 = ssub.s32 16, 16
          %853 = vsyncadd %s845, %s852
          %s854 = smul.addr %s19, 16
          %s855 = scalar_lea.hbm %s5, %s854
          %s857 = sshll.u32 %s847, 4
          %s858 = int_to_ptr.vmem [resolvable:$true] %s857
          %860 = dma.vmem_to_hbm [thread:$0]  %s858, 16, %s855, %s845
        $region44: #{my_dil_conv_net_forward.1} parent=39 // pred_fallthru
          _
      $region40: #{my_dil_conv_net_forward.1} parent=5 // pred_fallthru
        _
      %p861 = scmp.le.s32.totalorder 2, %s14
      // Predicated region
      $region45: #{my_dil_conv_net_forward.1} parent=5 // pred_check
        %p862 = pneg %p861
      $region46: #{my_dil_conv_net_forward.1} parent=5 // pred_check_branch
        %864 = sbr.rel (%p862) target = $region48
      $region47: #{my_dil_conv_net_forward.1} parent=5 // pred_region
        %s865 = ssub.s32 %s14, 2
        // Predicated region
        $region49: #{my_dil_conv_net_forward.1} parent=47 // pred_check
          %p866 = pneg %p153
        $region50: #{my_dil_conv_net_forward.1} parent=47 // pred_check_branch
          %868 = sbr.rel (%p866) target = $region52
        $region51: #{my_dil_conv_net_forward.1} parent=47 // pred_region
          %s869 = sand.u32 %s138, 1
          %s870 = scalar_lea.sflag [#allocation3], %s869
          %s871 = sand.u32 %s138, 1
          %s872 = scalar_lea.vmem [#allocation2], %s871
          %873 = dma.done %s870, 16
        $region52: #{my_dil_conv_net_forward.1} parent=47 // pred_fallthru
          _
      $region48: #{my_dil_conv_net_forward.1} parent=5 // pred_fallthru
        _
    $region6: #{my_dil_conv_net_forward.1} parent=1 // loop_footer
      %s18 = sadd.s32 1, %s14
    $region7: #{my_dil_conv_net_forward.1} parent=1 // loop_footer_branch
      %13 = sbr.rel target = $region3
    $region8: #{my_dil_conv_net_forward.1} parent=1 // loop_exit
      _
    %874 = vsyncpa [#allocation3], 1
    %s875 = scalar_lea.sflag [#allocation3], 1
    %876 = vsyncpa %s875, 1

</llo_original>
